<compile_context>
chip_gen: v7x
topology: tpu7x:2x2x1
jax: 0.10.0
libtpu: 0.0.40
codegen_flags: <defaults>
</compile_context>

<pallas_src>
import functools

import jax
import jax.numpy as jnp
from jax.experimental import pallas as pl
from jax.experimental.pallas import tpu as pltpu

IN_FEATURES = 120
HIDDEN = 84
NUM_CLASSES = 10
LANE = 128            # TPU lane width; all feature dims are padded to this.
DEFAULT_BLOCK_N = 1024


def _round_up(a, b):
    return (a + b - 1) // b * b


def classifier_kernel(x_ref, w1_ref, b1_ref, w2_ref, b2_ref, o_ref):
    # fc1: [TN,128]bf16 @ [128,128]bf16 -> f32 on the MXU; bias + tanh in f32.
    h = jnp.dot(x_ref[...], w1_ref[...], preferred_element_type=jnp.float32)
    h = jnp.tanh(h + b1_ref[...])
    # fc2: cast activations back to bf16 for the MXU, accumulate in f32.
    o = jnp.dot(h.astype(w2_ref.dtype), w2_ref[...],
                preferred_element_type=jnp.float32)
    o_ref[...] = (o + b2_ref[...]).astype(o_ref.dtype)


def prepare_params(w1, b1, w2, b2):
    """Pad params to lane-dense 128x128 slabs; weights bf16, biases f32.

    w1: [120, 84], b1: [84], w2: [84, C], b2: [C]  (stored (in, out), i.e. the
    transpose of PyTorch nn.Linear's (out, in) weight layout).
    Zero padding keeps the math exact: padded x lanes hit zero w1 rows, padded
    hidden lanes get tanh(0)=0 and zero w2 rows, padded class lanes are sliced.
    """
    num_classes = w2.shape[1]
    w1p = jnp.zeros((LANE, LANE), jnp.bfloat16).at[:IN_FEATURES, :HIDDEN].set(
        w1.astype(jnp.bfloat16))
    b1p = jnp.zeros((1, LANE), jnp.float32).at[0, :HIDDEN].set(
        b1.reshape(-1).astype(jnp.float32))
    w2p = jnp.zeros((LANE, LANE), jnp.bfloat16).at[:HIDDEN, :num_classes].set(
        w2.astype(jnp.bfloat16))
    b2p = jnp.zeros((1, LANE), jnp.float32).at[0, :num_classes].set(
        b2.reshape(-1).astype(jnp.float32))
    return w1p, b1p, w2p, b2p


@functools.partial(jax.jit, static_argnames=("num_classes", "block_n"))
def classifier_forward(x, w1p, b1p, w2p, b2p, *, num_classes=NUM_CLASSES,
                       block_n=DEFAULT_BLOCK_N):
    """x: [N, 120] float32 -> [N, num_classes] float32."""
    n = x.shape[0]
    # Batch tile: multiple of 16 (bf16 sublane packing), capped so a tiny
    # batch is still a single tile; default 1024 rows per grid step.
    tn = min(_round_up(block_n, 16), _round_up(n, 16))
    grid_n = pl.cdiv(n, tn)
    n_pad = grid_n * tn

    # Lane-dense, zero-padded bf16 input slab: [N_pad, 128].
    xp = jnp.zeros((n_pad, LANE), jnp.bfloat16)
    xp = xp.at[:n, :IN_FEATURES].set(x.astype(jnp.bfloat16))

    out = pl.pallas_call(
        classifier_kernel,
        out_shape=jax.ShapeDtypeStruct((n_pad, LANE), jnp.float32),
        grid_spec=pltpu.PrefetchScalarGridSpec(
            num_scalar_prefetch=0,
            grid=(grid_n,),
            in_specs=[
                pl.BlockSpec((tn, LANE), lambda i: (i, 0)),     # x tile (streamed)
                pl.BlockSpec((LANE, LANE), lambda i: (0, 0)),   # w1 (resident)
                pl.BlockSpec((1, LANE), lambda i: (0, 0)),      # b1 (resident)
                pl.BlockSpec((LANE, LANE), lambda i: (0, 0)),   # w2 (resident)
                pl.BlockSpec((1, LANE), lambda i: (0, 0)),      # b2 (resident)
            ],
            out_specs=pl.BlockSpec((tn, LANE), lambda i: (i, 0)),
        ),
        compiler_params=pltpu.CompilerParams(
            dimension_semantics=("parallel",)),
    )(xp, w1p, b1p, w2p, b2p)

    # Slice away batch padding and class-lane padding.
    return out[:n, :num_classes]


def init_params(key, num_classes=NUM_CLASSES):
    """Mimics nn.Linear's uniform(-1/sqrt(fan_in), 1/sqrt(fan_in)) init."""
    k1, k2, k3, k4 = jax.random.split(key, 4)
    bound1 = 1.0 / jnp.sqrt(jnp.float32(IN_FEATURES))
    bound2 = 1.0 / jnp.sqrt(jnp.float32(HIDDEN))
    w1 = jax.random.uniform(k1, (IN_FEATURES, HIDDEN), jnp.float32, -bound1, bound1)
    b1 = jax.random.uniform(k2, (HIDDEN,), jnp.float32, -bound1, bound1)
    w2 = jax.random.uniform(k3, (HIDDEN, num_classes), jnp.float32, -bound2, bound2)
    b2 = jax.random.uniform(k4, (num_classes,), jnp.float32, -bound2, bound2)
    return w1, b1, w2, b2


if __name__ == "__main__":
    key = jax.random.PRNGKey(0)
    kx, kp, kx2 = jax.random.split(key, 3)

    w1, b1, w2, b2 = init_params(kp, NUM_CLASSES)
    w1p, b1p, w2p, b2p = prepare_params(w1, b1, w2, b2)

    def ref_fwd(x):  # plain-JAX f32 reference, same semantics as the PyTorch forward
        return jnp.tanh(x @ w1 + b1) @ w2 + b2

    # bf16 inputs/weights on the MXU vs an f32 reference -> bf16-quantization tolerance.
    tol = dict(atol=3e-2, rtol=3e-2)

    # Small batch (matches the PyTorch spec's [N,120] usage): single grid step.
    n1 = 2
    x1 = jax.random.normal(kx, (n1, IN_FEATURES), jnp.float32)
    out1 = classifier_forward(x1, w1p, b1p, w2p, b2p, num_classes=NUM_CLASSES)
    jax.block_until_ready(out1)
    assert out1.shape == (n1, NUM_CLASSES)
    assert jnp.allclose(out1, ref_fwd(x1), **tol)

    # Larger batch with a small block to exercise the multi-tile pipelined path
    # (grid = 3 with block_n=128; padded tail rows are computed then sliced off).
    n2 = 300
    x2 = jax.random.normal(kx2, (n2, IN_FEATURES), jnp.float32)
    out2 = classifier_forward(x2, w1p, b1p, w2p, b2p, num_classes=NUM_CLASSES,
                              block_n=128)
    jax.block_until_ready(out2)
    assert out2.shape == (n2, NUM_CLASSES)
    assert jnp.allclose(out2, ref_fwd(x2), **tol)

    print("KERNEL_OK")
</pallas_src>

<mosaic_0001>
module attributes {stable_mosaic.version = 11 : i64} {
  func.func @classifier_kernel(%arg0: i32, %arg1: memref<16x128xbf16, #tpu.memory_space<vmem>>, %arg2: memref<128x128xbf16, #tpu.memory_space<vmem>>, %arg3: memref<1x128xf32, #tpu.memory_space<vmem>>, %arg4: memref<128x128xbf16, #tpu.memory_space<vmem>>, %arg5: memref<1x128xf32, #tpu.memory_space<vmem>>, %arg6: memref<16x128xf32, #tpu.memory_space<vmem>>) attributes {dimension_semantics = [#tpu.dimension_semantics<parallel>], iteration_bounds = array<i64: 1>, scalar_prefetch = 0 : i64, scratch_operands = 0 : i64, tpu.core_type = #tpu.core_type<tc>, window_params = [{transform_indices = @transform_0, window_bounds = array<i64: 16, 128>}, {pipeline_mode = #tpu.pipeline_mode<synchronous>, transform_indices = @transform_1, window_bounds = array<i64: 128, 128>}, {pipeline_mode = #tpu.pipeline_mode<synchronous>, transform_indices = @transform_2, window_bounds = array<i64: 1, 128>}, {pipeline_mode = #tpu.pipeline_mode<synchronous>, transform_indices = @transform_3, window_bounds = array<i64: 128, 128>}, {pipeline_mode = #tpu.pipeline_mode<synchronous>, transform_indices = @transform_4, window_bounds = array<i64: 1, 128>}, {transform_indices = @transform_5, window_bounds = array<i64: 16, 128>}]} {
    %c0 = arith.constant 0 : index
    %c0_0 = arith.constant 0 : index
    %0 = vector.load %arg1[%c0, %c0_0] : memref<16x128xbf16, #tpu.memory_space<vmem>>, vector<16x128xbf16>
    %c0_1 = arith.constant 0 : index
    %c0_2 = arith.constant 0 : index
    %1 = vector.load %arg2[%c0_1, %c0_2] : memref<128x128xbf16, #tpu.memory_space<vmem>>, vector<128x128xbf16>
    %cst = arith.constant dense<0.000000e+00> : vector<16x128xf32>
    %2 = tpu.matmul %0, %1, %cst {dimension_numbers = #tpu.dot_dimension_numbers<[1], [0], [0], [1], [0, 0, 1, 1], [], []>} : vector<16x128xbf16>, vector<128x128xbf16>, vector<16x128xf32> -> vector<16x128xf32>
    %c0_3 = arith.constant 0 : index
    %c0_4 = arith.constant 0 : index
    %3 = vector.load %arg3[%c0_3, %c0_4] : memref<1x128xf32, #tpu.memory_space<vmem>>, vector<1x128xf32>
    %4 = vector.broadcast %3 : vector<1x128xf32> to vector<16x128xf32>
    %5 = arith.addf %2, %4 : vector<16x128xf32>
    %6 = math.tanh %5 : vector<16x128xf32>
    %7 = arith.truncf %6 : vector<16x128xf32> to vector<16x128xbf16>
    %c0_5 = arith.constant 0 : index
    %c0_6 = arith.constant 0 : index
    %8 = vector.load %arg4[%c0_5, %c0_6] : memref<128x128xbf16, #tpu.memory_space<vmem>>, vector<128x128xbf16>
    %cst_7 = arith.constant dense<0.000000e+00> : vector<16x128xf32>
    %9 = tpu.matmul %7, %8, %cst_7 {dimension_numbers = #tpu.dot_dimension_numbers<[1], [0], [0], [1], [0, 0, 1, 1], [], []>} : vector<16x128xbf16>, vector<128x128xbf16>, vector<16x128xf32> -> vector<16x128xf32>
    %c0_8 = arith.constant 0 : index
    %c0_9 = arith.constant 0 : index
    %10 = vector.load %arg5[%c0_8, %c0_9] : memref<1x128xf32, #tpu.memory_space<vmem>>, vector<1x128xf32>
    %11 = vector.broadcast %10 : vector<1x128xf32> to vector<16x128xf32>
    %12 = arith.addf %9, %11 : vector<16x128xf32>
    %c0_10 = arith.constant 0 : index
    %c0_11 = arith.constant 0 : index
    %13 = vector.load %arg6[%c0_10, %c0_11] : memref<16x128xf32, #tpu.memory_space<vmem>>, vector<16x128xf32>
    tpu.vector_store %arg6[%c0_10, %c0_11], %12 {strides = array<i32>} : memref<16x128xf32, #tpu.memory_space<vmem>>, vector<16x128xf32>,
    return
  }
  func.func @transform_0(%arg0: i32) -> (i32, i32) {
    %c0_i32 = arith.constant 0 : i32
    %c0_i32_0 = arith.constant 0 : i32
    return %arg0, %c0_i32 : i32, i32
  }
  func.func @transform_1(%arg0: i32) -> (i32, i32) {
    %c0_i32 = arith.constant 0 : i32
    %c0_i32_0 = arith.constant 0 : i32
    %c0_i32_1 = arith.constant 0 : i32
    return %c0_i32, %c0_i32_0 : i32, i32
  }
  func.func @transform_2(%arg0: i32) -> (i32, i32) {
    %c0_i32 = arith.constant 0 : i32
    %c0_i32_0 = arith.constant 0 : i32
    %c0_i32_1 = arith.constant 0 : i32
    return %c0_i32, %c0_i32_0 : i32, i32
  }
  func.func @transform_3(%arg0: i32) -> (i32, i32) {
    %c0_i32 = arith.constant 0 : i32
    %c0_i32_0 = arith.constant 0 : i32
    %c0_i32_1 = arith.constant 0 : i32
    return %c0_i32, %c0_i32_0 : i32, i32
  }
  func.func @transform_4(%arg0: i32) -> (i32, i32) {
    %c0_i32 = arith.constant 0 : i32
    %c0_i32_0 = arith.constant 0 : i32
    %c0_i32_1 = arith.constant 0 : i32
    return %c0_i32, %c0_i32_0 : i32, i32
  }
  func.func @transform_5(%arg0: i32) -> (i32, i32) {
    %c0_i32 = arith.constant 0 : i32
    %c0_i32_0 = arith.constant 0 : i32
    return %arg0, %c0_i32 : i32, i32
  }
}

</mosaic_0001>

<llo_original>
// kernel: classifier_forward.1
$region0: #{classifier_forward.1}
  #allocation0 [shape = 'u32[]', space=smem, size = 0x4, offset = 0x4, fixed_abs, tag = 'smem constant byte address 0x4 - core index']
  #allocation1 [shape = 'u32[144,128]{1,0:T(1,128)}', space=vmem, size = 0x12000, scoped, tag = 'internal scratch']
  %s0 = inlined_call_operand.vmem [shape: bf16[16,128], index: 0, kind: input, shape index: {}]
  %s1 = inlined_call_operand.hbm [shape: bf16[128,128], index: 1, kind: input, shape index: {}]
  %s2 = inlined_call_operand.vmem [shape: f32[1,128], index: 2, kind: input, shape index: {}]
  %s3 = inlined_call_operand.hbm [shape: bf16[128,128], index: 3, kind: input, shape index: {}]
  %s4 = inlined_call_operand.vmem [shape: f32[1,128], index: 4, kind: input, shape index: {}]
  %s5 = inlined_call_operand.vmem [shape: f32[16,128], index: 5, kind: output, shape index: {}]
  %s6 = sld [smem:[#allocation0]]
  $region38: #{classifier_forward.1} parent=0
    _
  %s8 = ssub.s32 1, %s6
  %s9 = scalar_select 0, %s8, %s6
  $region1: #{classifier_forward.1} parent=0
    #allocation2 [shape = 'u8[32768]{0}', space=vmem, size = 0x8000, scoped, tag = 'input window, operand 1, single buffered']
    #allocation3 [shape = 's32[1]{0}', space=sflag, size = 0x4, scoped, tag = 'scoped memory for classifier_forward.1']
    #allocation4 [shape = 'u8[32768]{0}', space=vmem, size = 0x8000, scoped, tag = 'input window, operand 3, single buffered']
    #allocation5 [shape = 's32[1]{0}', space=sflag, size = 0x4, scoped, tag = 'scoped memory for classifier_forward.1']
    %10 = vsyncpa [#allocation3], 0
    %11 = vsyncpa [#allocation5], 0
    // Predicated region
    $region2: #{classifier_forward.1} parent=1 // pred_check
      _
    $region3: #{classifier_forward.1} parent=1 // pred_check_branch
      %13 = sbr.rel (0) target = $region5
    $region4: #{classifier_forward.1} parent=1 // pred_region
      _
    $region5: #{classifier_forward.1} parent=1 // pred_fallthru
      _
    // Predicated region
    $region6: #{classifier_forward.1} parent=1 // pred_check
      _
    $region7: #{classifier_forward.1} parent=1 // pred_check_branch
      %15 = sbr.rel (0) target = $region9
    $region8: #{classifier_forward.1} parent=1 // pred_region
      %s17 = ssub.s32 1024, 1024
      %18 = vsyncadd [#allocation3], %s17
      %s19 = sshll.u32 [#allocation2], 4
      %s20 = int_to_ptr.vmem [resolvable:$true] %s19
      %25 = dma.hbm_to_vmem [thread:$0]  %s1, 1024, %s20, [#allocation3], 64, 64, 4
    $region9: #{classifier_forward.1} parent=1 // pred_fallthru
      _
    // Predicated region
    $region10: #{classifier_forward.1} parent=1 // pred_check
      _
    $region11: #{classifier_forward.1} parent=1 // pred_check_branch
      %27 = sbr.rel (0) target = $region13
    $region12: #{classifier_forward.1} parent=1 // pred_region
      _
    $region13: #{classifier_forward.1} parent=1 // pred_fallthru
      _
    // Predicated region
    $region14: #{classifier_forward.1} parent=1 // pred_check
      _
    $region15: #{classifier_forward.1} parent=1 // pred_check_branch
      %29 = sbr.rel (0) target = $region17
    $region16: #{classifier_forward.1} parent=1 // pred_region
      %s31 = ssub.s32 1024, 1024
      %32 = vsyncadd [#allocation5], %s31
      %s33 = sshll.u32 [#allocation4], 4
      %s34 = int_to_ptr.vmem [resolvable:$true] %s33
      %39 = dma.hbm_to_vmem [thread:$0]  %s3, 1024, %s34, [#allocation5], 64, 64, 4
    $region17: #{classifier_forward.1} parent=1 // pred_fallthru
      _
    // Predicated region
    $region18: #{classifier_forward.1} parent=1 // pred_check
      _
    $region19: #{classifier_forward.1} parent=1 // pred_check_branch
      %41 = sbr.rel (0) target = $region21
    $region20: #{classifier_forward.1} parent=1 // pred_region
      _
    $region21: #{classifier_forward.1} parent=1 // pred_fallthru
      _
    // Predicated region
    $region22: #{classifier_forward.1} parent=1 // pred_check
      _
    $region23: #{classifier_forward.1} parent=1 // pred_check_branch
      %43 = sbr.rel (0) target = $region25
    $region24: #{classifier_forward.1} parent=1 // pred_region
      %44 = dma.done [#allocation3], 1024
    $region25: #{classifier_forward.1} parent=1 // pred_fallthru
      _
    // Predicated region
    $region26: #{classifier_forward.1} parent=1 // pred_check
      _
    $region27: #{classifier_forward.1} parent=1 // pred_check_branch
      %46 = sbr.rel (0) target = $region29
    $region28: #{classifier_forward.1} parent=1 // pred_region
      %47 = dma.done [#allocation5], 1024
    $region29: #{classifier_forward.1} parent=1 // pred_fallthru
      _
    %v49 = vld [vmem:[%s0] sm:$0xf]
    %v50 = vld [vmem:[%s0 + $0x4] sm:$0xf]
    %v51 = vld [vmem:[#allocation2] sm:$0xf]
    %v52 = vld [vmem:[#allocation2 + $0x4] sm:$0xf]
    %v53 = vld [vmem:[#allocation2 + $0x8] sm:$0xf]
    %v54 = vld [vmem:[#allocation2 + $0xc] sm:$0xf]
    %v55 = vld [vmem:[#allocation2 + $0x10] sm:$0xf]
    %v56 = vld [vmem:[#allocation2 + $0x14] sm:$0xf]
    %v57 = vld [vmem:[#allocation2 + $0x18] sm:$0xf]
    %v58 = vld [vmem:[#allocation2 + $0x1c] sm:$0xf]
    %v59 = vld [vmem:[#allocation2 + $0x20] sm:$0xf]
    %v60 = vld [vmem:[#allocation2 + $0x24] sm:$0xf]
    %v61 = vld [vmem:[#allocation2 + $0x28] sm:$0xf]
    %v62 = vld [vmem:[#allocation2 + $0x2c] sm:$0xf]
    %v63 = vld [vmem:[#allocation2 + $0x30] sm:$0xf]
    %v64 = vld [vmem:[#allocation2 + $0x34] sm:$0xf]
    %v65 = vld [vmem:[#allocation2 + $0x38] sm:$0xf]
    %v66 = vld [vmem:[#allocation2 + $0x3c] sm:$0xf]
    %v67 = vld [vmem:[%s2] sm:$0x1]
    %v69 = vlaneseq
    %v70 = vshrl.u32 %v69, 7
    %v71 = vsub.s32 0, %v70
    %v72 = vrot.slane %v67, %v71
    %v76 = vunpack.c.l.b16 %v49
    %v77 = vunpack.c.l.b16 %v50
    %v78 = vpack.c.b16 %v77, %v76
    %v96 = vunpack.c.l.b16 %v51
    %v97 = vunpack.c.l.b16 %v52
    %v98 = vunpack.c.l.b16 %v53
    %v99 = vunpack.c.l.b16 %v54
    %v100 = vunpack.c.l.b16 %v55
    %v101 = vunpack.c.l.b16 %v56
    %v102 = vunpack.c.l.b16 %v57
    %v103 = vunpack.c.l.b16 %v58
    %v104 = vunpack.c.l.b16 %v59
    %v105 = vunpack.c.l.b16 %v60
    %v106 = vunpack.c.l.b16 %v61
    %v107 = vunpack.c.l.b16 %v62
    %v108 = vunpack.c.l.b16 %v63
    %v109 = vunpack.c.l.b16 %v64
    %v110 = vunpack.c.l.b16 %v65
    %v111 = vunpack.c.l.b16 %v66
    %v112 = vpack.c.b16 %v97, %v96
    %v113 = vpack.c.b16 %v99, %v98
    %v114 = vpack.c.b16 %v101, %v100
    %v115 = vpack.c.b16 %v103, %v102
    %v116 = vpack.c.b16 %v105, %v104
    %v117 = vpack.c.b16 %v107, %v106
    %v118 = vpack.c.b16 %v109, %v108
    %v119 = vpack.c.b16 %v111, %v110
    %128 = vmatprep.subr.bf16.mxu0 0
    %129 = vmatpush1.bf16.msra.mxu0 %v112
    %130 = vmatprep.subr.bf16.mxu0 0
    %131 = vmatpush1.bf16.msra.mxu0 %v113
    %132 = vmatprep.subr.bf16.mxu0 0
    %133 = vmatpush1.bf16.msra.mxu0 %v114
    %134 = vmatprep.subr.bf16.mxu0 0
    %135 = vmatpush1.bf16.msra.mxu0 %v115
    %136 = vmatprep.subr.bf16.mxu0 0
    %137 = vmatpush1.bf16.msra.mxu0 %v116
    %138 = vmatprep.subr.bf16.mxu0 0
    %139 = vmatpush1.bf16.msra.mxu0 %v117
    %140 = vmatprep.subr.bf16.mxu0 0
    %141 = vmatpush1.bf16.msra.mxu0 %v118
    %142 = vmatprep.subr.bf16.mxu0 0
    %143 = vmatpush1.bf16.msra.mxu0 %v119
    %144 = vmatprep.subr.bf16.mxu0 0
    %145 = vmatpush1.bf16.msra.mxu0 0
    %146 = vmatprep.subr.bf16.mxu0 0
    %147 = vmatpush1.bf16.msra.mxu0 0
    %148 = vmatprep.subr.bf16.mxu0 0
    %149 = vmatpush1.bf16.msra.mxu0 0
    %150 = vmatprep.subr.bf16.mxu0 0
    %151 = vmatpush1.bf16.msra.mxu0 0
    %152 = vmatprep.subr.bf16.mxu0 0
    %153 = vmatpush1.bf16.msra.mxu0 0
    %154 = vmatprep.subr.bf16.mxu0 0
    %155 = vmatpush1.bf16.msra.mxu0 0
    %156 = vmatprep.subr.bf16.mxu0 0
    %157 = vmatpush1.bf16.msra.mxu0 0
    %158 = vmatprep.subr.bf16.mxu0 0
    %159 = vmatpush1.bf16.msra.mxu0 0
    %160 = vmatprep.mubr.bf16.mxu0 0
    %161 = vmatmul.mubr.bf16.gmra.mrb[0].mxu0 %v78
    %v162 = vpop.f32.mrb[0].mxu0
    %v163 = vadd.f32 %v72, %v162
    %v164 = vpop.f32.mrb[0].mxu0
    %v165 = vpop.f32.mrb[0].mxu0
    %v166 = vadd.f32 %v72, %v165
    %v167 = vpop.f32.mrb[0].mxu0
    %168 = vdwg.mxu0
    %v169 = vtanh.pop %v163
    %v170 = vtanh.pop %v166
    %v171 = vpack.c.bf16 %v170, %v169
    %v172 = vld [vmem:[#allocation4] sm:$0xf]
    %v173 = vld [vmem:[#allocation4 + $0x4] sm:$0xf]
    %v174 = vld [vmem:[#allocation4 + $0x8] sm:$0xf]
    %v175 = vld [vmem:[#allocation4 + $0xc] sm:$0xf]
    %v176 = vld [vmem:[#allocation4 + $0x10] sm:$0xf]
    %v177 = vld [vmem:[#allocation4 + $0x14] sm:$0xf]
    %v178 = vld [vmem:[#allocation4 + $0x18] sm:$0xf]
    %v179 = vld [vmem:[#allocation4 + $0x1c] sm:$0xf]
    %v180 = vld [vmem:[#allocation4 + $0x20] sm:$0xf]
    %v181 = vld [vmem:[#allocation4 + $0x24] sm:$0xf]
    %v182 = vld [vmem:[#allocation4 + $0x28] sm:$0xf]
    %v183 = vld [vmem:[#allocation4 + $0x2c] sm:$0xf]
    %v184 = vld [vmem:[#allocation4 + $0x30] sm:$0xf]
    %v185 = vld [vmem:[#allocation4 + $0x34] sm:$0xf]
    %v186 = vld [vmem:[#allocation4 + $0x38] sm:$0xf]
    %v187 = vld [vmem:[#allocation4 + $0x3c] sm:$0xf]
    %v188 = vld [vmem:[%s4] sm:$0x1]
    %v190 = vlaneseq
    %v191 = vshrl.u32 %v190, 7
    %v192 = vsub.s32 0, %v191
    %v193 = vrot.slane %v188, %v192
    %v211 = vunpack.c.l.b16 %v172
    %v212 = vunpack.c.l.b16 %v173
    %v213 = vunpack.c.l.b16 %v174
    %v214 = vunpack.c.l.b16 %v175
    %v215 = vunpack.c.l.b16 %v176
    %v216 = vunpack.c.l.b16 %v177
    %v217 = vunpack.c.l.b16 %v178
    %v218 = vunpack.c.l.b16 %v179
    %v219 = vunpack.c.l.b16 %v180
    %v220 = vunpack.c.l.b16 %v181
    %v221 = vunpack.c.l.b16 %v182
    %v222 = vunpack.c.l.b16 %v183
    %v223 = vunpack.c.l.b16 %v184
    %v224 = vunpack.c.l.b16 %v185
    %v225 = vunpack.c.l.b16 %v186
    %v226 = vunpack.c.l.b16 %v187
    %v227 = vpack.c.b16 %v212, %v211
    %v228 = vpack.c.b16 %v214, %v213
    %v229 = vpack.c.b16 %v216, %v215
    %v230 = vpack.c.b16 %v218, %v217
    %v231 = vpack.c.b16 %v220, %v219
    %v232 = vpack.c.b16 %v222, %v221
    %v233 = vpack.c.b16 %v224, %v223
    %v234 = vpack.c.b16 %v226, %v225
    %243 = vmatprep.subr.bf16.mxu0 0
    %244 = vmatpush1.bf16.msra.mxu0 %v227
    %245 = vmatprep.subr.bf16.mxu0 0
    %246 = vmatpush1.bf16.msra.mxu0 %v228
    %247 = vmatprep.subr.bf16.mxu0 0
    %248 = vmatpush1.bf16.msra.mxu0 %v229
    %249 = vmatprep.subr.bf16.mxu0 0
    %250 = vmatpush1.bf16.msra.mxu0 %v230
    %251 = vmatprep.subr.bf16.mxu0 0
    %252 = vmatpush1.bf16.msra.mxu0 %v231
    %253 = vmatprep.subr.bf16.mxu0 0
    %254 = vmatpush1.bf16.msra.mxu0 %v232
    %255 = vmatprep.subr.bf16.mxu0 0
    %256 = vmatpush1.bf16.msra.mxu0 %v233
    %257 = vmatprep.subr.bf16.mxu0 0
    %258 = vmatpush1.bf16.msra.mxu0 %v234
    %259 = vmatprep.subr.bf16.mxu0 0
    %260 = vmatpush1.bf16.msra.mxu0 0
    %261 = vmatprep.subr.bf16.mxu0 0
    %262 = vmatpush1.bf16.msra.mxu0 0
    %263 = vmatprep.subr.bf16.mxu0 0
    %264 = vmatpush1.bf16.msra.mxu0 0
    %265 = vmatprep.subr.bf16.mxu0 0
    %266 = vmatpush1.bf16.msra.mxu0 0
    %267 = vmatprep.subr.bf16.mxu0 0
    %268 = vmatpush1.bf16.msra.mxu0 0
    %269 = vmatprep.subr.bf16.mxu0 0
    %270 = vmatpush1.bf16.msra.mxu0 0
    %271 = vmatprep.subr.bf16.mxu0 0
    %272 = vmatpush1.bf16.msra.mxu0 0
    %273 = vmatprep.subr.bf16.mxu0 0
    %274 = vmatpush1.bf16.msra.mxu0 0
    %275 = vmatprep.mubr.bf16.mxu0 0
    %276 = vmatmul.mubr.bf16.gmra.mrb[0].mxu0 %v171
    %v277 = vpop.f32.mrb[0].mxu0
    %v278 = vadd.f32 %v193, %v277
    %v279 = vpop.f32.mrb[0].mxu0
    %v280 = vpop.f32.mrb[0].mxu0
    %v281 = vadd.f32 %v193, %v280
    %v282 = vpop.f32.mrb[0].mxu0
    %283 = vdwg.mxu0
    %284 = vst [vmem:[%s5] sm:$0xff] %v278
    %285 = vst [vmem:[%s5 + $0x8] sm:$0xff] %v281
    // Predicated region
    $region30: #{classifier_forward.1} parent=1 // pred_check
      _
    $region31: #{classifier_forward.1} parent=1 // pred_check_branch
      %287 = sbr.rel (0) target = $region33
    $region32: #{classifier_forward.1} parent=1 // pred_region
      _
    $region33: #{classifier_forward.1} parent=1 // pred_fallthru
      _
    // Predicated region
    $region34: #{classifier_forward.1} parent=1 // pred_check
      _
    $region35: #{classifier_forward.1} parent=1 // pred_check_branch
      %289 = sbr.rel (0) target = $region37
    $region36: #{classifier_forward.1} parent=1 // pred_region
      _
    $region37: #{classifier_forward.1} parent=1 // pred_fallthru
      _
    %290 = vsyncpa [#allocation3], 1
    %291 = vsyncpa [#allocation5], 1

</llo_original>
